<compile_context>
chip_gen: v5e
topology: v5e:2x2
jax: 0.10.0
libtpu: 0.0.40
codegen_flags: <defaults>
</compile_context>

<pallas_src>
import functools

import jax
import jax.numpy as jnp
from jax.experimental import pallas as pl
from jax.experimental.pallas import tpu as pltpu

OUT_PAD = 128  # lane-dense output width; real logits live in the first num_labels cols


def _roberta_head_kernel(x_ref, w1_ref, b1_ref, w2_ref, b2_ref, o_ref):
    # x_ref: [TB, H] bf16 CLS activations; w1/w2 bf16 (MXU); b1/b2 f32 (VPU epilogue).
    # TODO(synk): dropout is treated as inference-mode identity (no RNG masking).
    h = jnp.dot(x_ref[...], w1_ref[...], preferred_element_type=jnp.float32)
    h = jnp.tanh(h + b1_ref[...])                                # [TB, H] f32
    out = jnp.dot(h.astype(jnp.bfloat16), w2_ref[...],
                  preferred_element_type=jnp.float32)
    o_ref[...] = (out + b2_ref[...]).astype(o_ref.dtype)         # [TB, OUT_PAD]


def prepare_roberta_head_params(w_dense, b_dense, w_out, b_out):
    """One-time parameter prep (hoisted out of the per-call hot path):
    bf16 casts for the MXU and lane-dense OUT_PAD padding of out_proj."""
    H = w_dense.shape[0]
    num_labels = w_out.shape[1]
    w1 = w_dense.astype(jnp.bfloat16)                                    # [H, H]
    b1 = jnp.reshape(b_dense, (1, H)).astype(jnp.float32)                # [1, H]
    w2 = jnp.zeros((H, OUT_PAD), jnp.bfloat16).at[:, :num_labels].set(
        w_out.astype(jnp.bfloat16))                                      # [H, OUT_PAD]
    b2 = jnp.zeros((1, OUT_PAD), jnp.float32).at[:, :num_labels].set(
        jnp.reshape(b_out, (1, num_labels)).astype(jnp.float32))         # [1, OUT_PAD]
    return w1, b1, w2, b2


def _pick_batch_tile(B, tb):
    """Batch tile: multiple of 8 (sublane), big enough to amortize per-step
    overhead, small enough that the grid has >= 2 steps (v7x has 2 cores)."""
    if B <= 8:
        return B                       # single block == full (tiny) batch dim
    half = -(-B // 2)                  # ceil(B/2): guarantees >= 2 grid steps
    half = -(-half // 8) * 8           # round up to a sublane multiple
    TB = min(tb, half)
    return max(8, (TB // 8) * 8)


@functools.partial(jax.jit, static_argnames=("num_labels", "tb"))
def roberta_classification_head(features, w1, b1, w2, b2, *, num_labels, tb=512):
    """features: [B, S, H]; (w1, b1, w2, b2) from prepare_roberta_head_params().
    Returns logits [B, num_labels] in features.dtype."""
    B, S, H = features.shape

    # CLS-token select + bf16 cast.  Under jit this producer fuses into the Mosaic
    # call (allow_input_fusion), so no sliced/padded activation copy hits HBM.
    x = features[:, 0, :].astype(jnp.bfloat16)                   # [B, H]

    TB = _pick_batch_tile(B, tb)
    grid = (pl.cdiv(B, TB),)           # no explicit pad: last block is clamped

    cost = pl.CostEstimate(
        flops=2 * B * H * H + 2 * B * H * OUT_PAD,
        transcendentals=B * H,
        bytes_accessed=(B * H * 2 + w1.size * 2 + b1.size * 4
                        + w2.size * 2 + b2.size * 4 + B * OUT_PAD * 4),
    )

    # Resident (constant index_map) operands: single-buffered to save VMEM.
    resident = functools.partial(pl.BlockSpec, pipeline_mode=pl.Buffered(1))

    out = pl.pallas_call(
        _roberta_head_kernel,
        out_shape=jax.ShapeDtypeStruct((B, OUT_PAD), features.dtype),
        grid_spec=pltpu.PrefetchScalarGridSpec(
            num_scalar_prefetch=0,
            grid=grid,
            in_specs=[
                pl.BlockSpec((TB, H), lambda i: (i, 0)),          # activations: batch-tiled
                resident((H, H), lambda i: (0, 0)),               # W_dense: resident
                resident((1, H), lambda i: (0, 0)),               # b_dense: resident
                resident((H, OUT_PAD), lambda i: (0, 0)),         # W_out (padded): resident
                resident((1, OUT_PAD), lambda i: (0, 0)),         # b_out (padded): resident
            ],
            out_specs=pl.BlockSpec((TB, OUT_PAD), lambda i: (i, 0)),
        ),
        compiler_params=pltpu.CompilerParams(
            dimension_semantics=("parallel",),                    # shard batch over 2 TCs (v7x)
            allow_input_fusion=[True, False, False, False, False]),
        cost_estimate=cost,
    )(x, w1, b1, w2, b2)

    return out[:, :num_labels]


if __name__ == "__main__":
    # Small shapes consistent with the module's forward: [B, S, H] -> [B, 2]
    B, S, H = 2, 8, 32
    NUM_LABELS = 2

    key = jax.random.PRNGKey(0)
    k_feat, k_w1, k_b1, k_w2, k_b2 = jax.random.split(key, 5)

    features = jax.random.normal(k_feat, (B, S, H), dtype=jnp.float32)

    # Deterministic synthetic parameters (stored as [in, out] = W.T of PyTorch).
    w_dense = jax.random.normal(k_w1, (H, H), dtype=jnp.float32) * 0.02
    b_dense = jax.random.normal(k_b1, (H,), dtype=jnp.float32) * 0.02
    w_out = jax.random.normal(k_w2, (H, NUM_LABELS), dtype=jnp.float32) * 0.02
    b_out = jax.random.normal(k_b2, (NUM_LABELS,), dtype=jnp.float32) * 0.02

    # One-time weight prep (bf16 + OUT_PAD padding), reused across all calls.
    w1, b1, w2, b2 = prepare_roberta_head_params(w_dense, b_dense, w_out, b_out)

    logits = roberta_classification_head(features, w1, b1, w2, b2,
                                         num_labels=NUM_LABELS)
    logits = jax.block_until_ready(logits)

    # Pure-JAX f32 reference (kernel uses bf16 MXU inputs with f32 accumulation,
    # so tolerance accounts for the bf16 rounding of activations/weights).
    x_ref = features[:, 0, :]
    ref = jnp.tanh(x_ref @ w_dense + b_dense) @ w_out + b_out
    assert logits.shape == (B, NUM_LABELS)
    assert jnp.allclose(logits, ref, atol=1e-2, rtol=1e-2)

    print("KERNEL_OK")
</pallas_src>

<mosaic_0001>
module attributes {stable_mosaic.version = 11 : i64} {
  func.func @_roberta_head_kernel(%arg0: i32, %arg1: memref<2x32xbf16, #tpu.memory_space<vmem>>, %arg2: memref<32x32xbf16, #tpu.memory_space<vmem>>, %arg3: memref<1x32xf32, #tpu.memory_space<vmem>>, %arg4: memref<32x128xbf16, #tpu.memory_space<vmem>>, %arg5: memref<1x128xf32, #tpu.memory_space<vmem>>, %arg6: memref<2x128xf32, #tpu.memory_space<vmem>>) attributes {dimension_semantics = [#tpu.dimension_semantics<parallel>], iteration_bounds = array<i64: 1>, scalar_prefetch = 0 : i64, scratch_operands = 0 : i64, tpu.core_type = #tpu.core_type<tc>, window_params = [{transform_indices = @transform_0, window_bounds = array<i64: 2, 32>}, {pipeline_mode = #tpu.pipeline_mode<synchronous>, transform_indices = @transform_1, window_bounds = array<i64: 32, 32>}, {pipeline_mode = #tpu.pipeline_mode<synchronous>, transform_indices = @transform_2, window_bounds = array<i64: 1, 32>}, {pipeline_mode = #tpu.pipeline_mode<synchronous>, transform_indices = @transform_3, window_bounds = array<i64: 32, 128>}, {pipeline_mode = #tpu.pipeline_mode<synchronous>, transform_indices = @transform_4, window_bounds = array<i64: 1, 128>}, {transform_indices = @transform_5, window_bounds = array<i64: 2, 128>}]} {
    %c0 = arith.constant 0 : index
    %c0_0 = arith.constant 0 : index
    %0 = vector.load %arg1[%c0, %c0_0] : memref<2x32xbf16, #tpu.memory_space<vmem>>, vector<2x32xbf16>
    %c0_1 = arith.constant 0 : index
    %c0_2 = arith.constant 0 : index
    %1 = vector.load %arg2[%c0_1, %c0_2] : memref<32x32xbf16, #tpu.memory_space<vmem>>, vector<32x32xbf16>
    %cst = arith.constant dense<0.000000e+00> : vector<2x32xf32>
    %2 = tpu.matmul %0, %1, %cst {dimension_numbers = #tpu.dot_dimension_numbers<[1], [0], [0], [1], [0, 0, 1, 1], [], []>} : vector<2x32xbf16>, vector<32x32xbf16>, vector<2x32xf32> -> vector<2x32xf32>
    %c0_3 = arith.constant 0 : index
    %c0_4 = arith.constant 0 : index
    %3 = vector.load %arg3[%c0_3, %c0_4] : memref<1x32xf32, #tpu.memory_space<vmem>>, vector<1x32xf32>
    %4 = vector.broadcast %3 : vector<1x32xf32> to vector<2x32xf32>
    %5 = arith.addf %2, %4 : vector<2x32xf32>
    %6 = math.tanh %5 : vector<2x32xf32>
    %7 = arith.truncf %6 : vector<2x32xf32> to vector<2x32xbf16>
    %c0_5 = arith.constant 0 : index
    %c0_6 = arith.constant 0 : index
    %8 = vector.load %arg4[%c0_5, %c0_6] : memref<32x128xbf16, #tpu.memory_space<vmem>>, vector<32x128xbf16>
    %cst_7 = arith.constant dense<0.000000e+00> : vector<2x128xf32>
    %9 = tpu.matmul %7, %8, %cst_7 {dimension_numbers = #tpu.dot_dimension_numbers<[1], [0], [0], [1], [0, 0, 1, 1], [], []>} : vector<2x32xbf16>, vector<32x128xbf16>, vector<2x128xf32> -> vector<2x128xf32>
    %c0_8 = arith.constant 0 : index
    %c0_9 = arith.constant 0 : index
    %10 = vector.load %arg5[%c0_8, %c0_9] : memref<1x128xf32, #tpu.memory_space<vmem>>, vector<1x128xf32>
    %11 = vector.broadcast %10 : vector<1x128xf32> to vector<2x128xf32>
    %12 = arith.addf %9, %11 : vector<2x128xf32>
    %c0_10 = arith.constant 0 : index
    %c0_11 = arith.constant 0 : index
    %13 = vector.load %arg6[%c0_10, %c0_11] : memref<2x128xf32, #tpu.memory_space<vmem>>, vector<2x128xf32>
    tpu.vector_store %arg6[%c0_10, %c0_11], %12 {strides = array<i32>} : memref<2x128xf32, #tpu.memory_space<vmem>>, vector<2x128xf32>,
    return
  }
  func.func @transform_0(%arg0: i32) -> (i32, i32) {
    %c0_i32 = arith.constant 0 : i32
    %c0_i32_0 = arith.constant 0 : i32
    return %arg0, %c0_i32 : i32, i32
  }
  func.func @transform_1(%arg0: i32) -> (i32, i32) {
    %c0_i32 = arith.constant 0 : i32
    %c0_i32_0 = arith.constant 0 : i32
    %c0_i32_1 = arith.constant 0 : i32
    return %c0_i32, %c0_i32_0 : i32, i32
  }
  func.func @transform_2(%arg0: i32) -> (i32, i32) {
    %c0_i32 = arith.constant 0 : i32
    %c0_i32_0 = arith.constant 0 : i32
    %c0_i32_1 = arith.constant 0 : i32
    return %c0_i32, %c0_i32_0 : i32, i32
  }
  func.func @transform_3(%arg0: i32) -> (i32, i32) {
    %c0_i32 = arith.constant 0 : i32
    %c0_i32_0 = arith.constant 0 : i32
    %c0_i32_1 = arith.constant 0 : i32
    return %c0_i32, %c0_i32_0 : i32, i32
  }
  func.func @transform_4(%arg0: i32) -> (i32, i32) {
    %c0_i32 = arith.constant 0 : i32
    %c0_i32_0 = arith.constant 0 : i32
    %c0_i32_1 = arith.constant 0 : i32
    return %c0_i32, %c0_i32_0 : i32, i32
  }
  func.func @transform_5(%arg0: i32) -> (i32, i32) {
    %c0_i32 = arith.constant 0 : i32
    %c0_i32_0 = arith.constant 0 : i32
    return %arg0, %c0_i32 : i32, i32
  }
}

</mosaic_0001>

<llo_original>
// kernel: roberta_classification_head.2
$region0: #{roberta_classification_head.2}
  #allocation0 [shape = 'u32[]', space=smem, size = 0x4, offset = 0x4, fixed_abs, tag = 'smem constant byte address 0x4 - core index']
  #allocation1 [shape = 'u32[72,128]{1,0:T(1,128)}', space=vmem, size = 0x9000, scoped, tag = 'internal scratch']
  %s0 = inlined_call_operand.hbm [shape: bf16[32,32], index: 0, kind: input, shape index: {}]
  %s1 = inlined_call_operand.vmem [shape: f32[1,32], index: 1, kind: input, shape index: {}]
  %s2 = inlined_call_operand.hbm [shape: bf16[32,128], index: 2, kind: input, shape index: {}]
  %s3 = inlined_call_operand.vmem [shape: f32[1,128], index: 3, kind: input, shape index: {}]
  %s4 = inlined_call_operand.vmem [shape: bf16[2,1,32], index: 4, kind: input, shape index: {}]
  %s5 = inlined_call_operand.hbm [shape: f32[2,128], index: 5, kind: output, shape index: {}]
  %s6 = sld [smem:[#allocation0]]
  $region38: #{roberta_classification_head.2} parent=0
    _
  %s8 = ssub.s32 1, %s6
  %s9 = scalar_select 0, %s8, %s6
  $region1: #{roberta_classification_head.2} parent=0
    #allocation2 [shape = 'u8[8192]{0}', space=vmem, size = 0x2000, scoped, tag = 'input window, operand 1, single buffered']
    #allocation3 [shape = 's32[1]{0}', space=sflag, size = 0x4, scoped, tag = 'scoped memory for roberta_classification_head.2']
    #allocation4 [shape = 's32[1]{0}', space=sflag, size = 0x4, scoped, tag = 'scoped memory for roberta_classification_head.2']
    #allocation5 [shape = 'u8[8192]{0}', space=vmem, size = 0x2000, scoped, tag = 'input window, operand 3, single buffered']
    #allocation6 [shape = 's32[1]{0}', space=sflag, size = 0x4, scoped, tag = 'scoped memory for roberta_classification_head.2']
    #allocation7 [shape = 'u8[1024]{0}', space=vmem, size = 0x400, scoped, tag = 'output window, operand 0, single buffered']
    #allocation8 [shape = 'u8[512]{0}', space=vmem, size = 0x400, dematerialized = true, scoped, tag = 'FusionAdapter Buffer %fusion.1 = bf16[2,32]{1,0:T(2,128)(2,1)} fusion(%param_4.1), kind=kLoop, calls=%fused_computation.2.clone']
    %10 = vsyncpa [#allocation3], 0
    %11 = vsyncpa [#allocation6], 0
    %12 = vsyncpa [#allocation4], 0
    // Predicated region
    $region2: #{roberta_classification_head.2} parent=1 // pred_check
      _
    $region3: #{roberta_classification_head.2} parent=1 // pred_check_branch
      %14 = sbr.rel (0) target = $region5
    $region4: #{roberta_classification_head.2} parent=1 // pred_region
      _
    $region5: #{roberta_classification_head.2} parent=1 // pred_fallthru
      _
    // Predicated region
    $region6: #{roberta_classification_head.2} parent=1 // pred_check
      _
    $region7: #{roberta_classification_head.2} parent=1 // pred_check_branch
      %16 = sbr.rel (0) target = $region9
    $region8: #{roberta_classification_head.2} parent=1 // pred_region
      %18 = vsyncadd [#allocation3], 0
      %s19 = sshll.u32 %s0, 4
      %s20 = int_to_ptr.hbm [resolvable:$true] %s19
      %s21 = sshll.u32 [#allocation2], 4
      %s22 = int_to_ptr.vmem [resolvable:$true] %s21
      %27 = dma.hbm_to_vmem [thread:$0]  %s20, 256, %s22, [#allocation3], 64, 64, 4
    $region9: #{roberta_classification_head.2} parent=1 // pred_fallthru
      _
    // Predicated region
    $region10: #{roberta_classification_head.2} parent=1 // pred_check
      _
    $region11: #{roberta_classification_head.2} parent=1 // pred_check_branch
      %29 = sbr.rel (0) target = $region13
    $region12: #{roberta_classification_head.2} parent=1 // pred_region
      _
    $region13: #{roberta_classification_head.2} parent=1 // pred_fallthru
      _
    // Predicated region
    $region14: #{roberta_classification_head.2} parent=1 // pred_check
      _
    $region15: #{roberta_classification_head.2} parent=1 // pred_check_branch
      %31 = sbr.rel (0) target = $region17
    $region16: #{roberta_classification_head.2} parent=1 // pred_region
      %33 = vsyncadd [#allocation6], 0
      %s34 = sshll.u32 %s2, 4
      %s35 = int_to_ptr.hbm [resolvable:$true] %s34
      %s36 = sshll.u32 [#allocation5], 4
      %s37 = int_to_ptr.vmem [resolvable:$true] %s36
      %42 = dma.hbm_to_vmem [thread:$0]  %s35, 256, %s37, [#allocation6], 64, 64, 4
    $region17: #{roberta_classification_head.2} parent=1 // pred_fallthru
      _
    // Predicated region
    $region18: #{roberta_classification_head.2} parent=1 // pred_check
      _
    $region19: #{roberta_classification_head.2} parent=1 // pred_check_branch
      %44 = sbr.rel (0) target = $region21
    $region20: #{roberta_classification_head.2} parent=1 // pred_region
      _
    $region21: #{roberta_classification_head.2} parent=1 // pred_fallthru
      _
    // Predicated region
    $region22: #{roberta_classification_head.2} parent=1 // pred_check
      _
    $region23: #{roberta_classification_head.2} parent=1 // pred_check_branch
      %46 = sbr.rel (0) target = $region25
    $region24: #{roberta_classification_head.2} parent=1 // pred_region
      %48 = dma.done [#allocation3], 256
    $region25: #{roberta_classification_head.2} parent=1 // pred_fallthru
      _
    // Predicated region
    $region26: #{roberta_classification_head.2} parent=1 // pred_check
      _
    $region27: #{roberta_classification_head.2} parent=1 // pred_check_branch
      %50 = sbr.rel (0) target = $region29
    $region28: #{roberta_classification_head.2} parent=1 // pred_region
      %52 = dma.done [#allocation6], 256
    $region29: #{roberta_classification_head.2} parent=1 // pred_fallthru
      _
    %s54 = sor.u32 3, 1
    %s55 = sand.u32 %s54, 1
    %v56 = vld [vmem:[%s4] sm:%s55]
    %v57 = vunpack.c.l.bf16 %v56
    %v58 = vunpack.c.h.bf16 %v56
    %v59 = vpack.c.bf16 0.0, %v57
    %s61 = ssub.s32 2, 1
    %62 = vst [vmem:[#allocation8] sm:%s61] %v59
    %v64 = vld [vmem:[#allocation8] sm:$0x1]
    %v65 = vld [vmem:[#allocation2] sm:$0xf]
    %v66 = vld [vmem:[#allocation2 + $0x4] sm:$0xf]
    %v67 = vld [vmem:[#allocation2 + $0x8] sm:$0xf]
    %v68 = vld [vmem:[#allocation2 + $0xc] sm:$0xf]
    %v69 = vld [vmem:[%s1] sm:$0x1]
    %v71 = vperm.slane %v69, 0
    %v77 = vunpack.c.l.b16 %v65
    %v78 = vunpack.c.l.b16 %v66
    %v79 = vunpack.c.l.b16 %v67
    %v80 = vunpack.c.l.b16 %v68
    %v81 = vpack.c.b16 %v78, %v77
    %v82 = vpack.c.b16 %v80, %v79
    %vm85 = vcmask 261120
    %v87 = vsel %vm85, %v64, 0
    %89 = vmatpush.bf16.msra.mxu0 0
    %90 = vmatpush.bf16.msra.mxu0 0
    %91 = vmatpush.bf16.msra.mxu0 0
    %92 = vmatpush.bf16.msra.mxu0 0
    %93 = vmatpush.bf16.msra.mxu0 0
    %94 = vmatpush.bf16.msra.mxu0 0
    %95 = vmatpush.bf16.msra.mxu0 %v82
    %96 = vmatpush.bf16.msra.mxu0 %v81
    %97 = vmatmul.bf16.gmra.mxu0 %v87
    %v98 = vpop.f32.mrf.mxu0
    %v99 = vadd.f32 %v71, %v98
    %v100 = vpop.f32.mrf.mxu0
    %101 = vdwg.mxu0
    %v102 = vtanh.pop %v99
    %v103 = vpack.c.bf16 %v102, %v102
    %v104 = vld [vmem:[#allocation5] sm:$0xf]
    %v105 = vld [vmem:[#allocation5 + $0x4] sm:$0xf]
    %v106 = vld [vmem:[#allocation5 + $0x8] sm:$0xf]
    %v107 = vld [vmem:[#allocation5 + $0xc] sm:$0xf]
    %v108 = vld [vmem:[%s3] sm:$0x1]
    %v110 = vperm.slane %v108, 0
    %v116 = vunpack.c.l.b16 %v104
    %v117 = vunpack.c.l.b16 %v105
    %v118 = vunpack.c.l.b16 %v106
    %v119 = vunpack.c.l.b16 %v107
    %v120 = vpack.c.b16 %v117, %v116
    %v121 = vpack.c.b16 %v119, %v118
    %v125 = vsel %vm85, %v103, 0
    %127 = vmatpush.bf16.msra.mxu0 0
    %128 = vmatpush.bf16.msra.mxu0 0
    %129 = vmatpush.bf16.msra.mxu0 0
    %130 = vmatpush.bf16.msra.mxu0 0
    %131 = vmatpush.bf16.msra.mxu0 0
    %132 = vmatpush.bf16.msra.mxu0 0
    %133 = vmatpush.bf16.msra.mxu0 %v121
    %134 = vmatpush.bf16.msra.mxu0 %v120
    %135 = vmatmul.bf16.gmra.mxu0 %v125
    %v136 = vpop.f32.mrf.mxu0
    %v137 = vadd.f32 %v110, %v136
    %v138 = vpop.f32.mrf.mxu0
    %139 = vdwg.mxu0
    %140 = vst [vmem:[#allocation7] sm:$0x3] %v137
    // Predicated region
    $region30: #{roberta_classification_head.2} parent=1 // pred_check
      _
    $region31: #{roberta_classification_head.2} parent=1 // pred_check_branch
      %142 = sbr.rel (0) target = $region33
    $region32: #{roberta_classification_head.2} parent=1 // pred_region
      %144 = vsyncadd [#allocation4], 0
      %s146 = sshll.u32 [#allocation7], 4
      %s147 = int_to_ptr.vmem [resolvable:$true] %s146
      %s148 = sshll.u32 %s5, 4
      %s149 = int_to_ptr.hbm [resolvable:$true] %s148
      %151 = dma.vmem_to_hbm [thread:$0]  %s147, 32, %s149, [#allocation4]
    $region33: #{roberta_classification_head.2} parent=1 // pred_fallthru
      _
    // Predicated region
    $region34: #{roberta_classification_head.2} parent=1 // pred_check
      _
    $region35: #{roberta_classification_head.2} parent=1 // pred_check_branch
      %153 = sbr.rel (0) target = $region37
    $region36: #{roberta_classification_head.2} parent=1 // pred_region
      %155 = dma.done [#allocation4], 32
    $region37: #{roberta_classification_head.2} parent=1 // pred_fallthru
      _
    %156 = vsyncpa [#allocation3], 1
    %157 = vsyncpa [#allocation6], 1
    %158 = vsyncpa [#allocation4], 1

</llo_original>
